<compile_context>
chip_gen: v6e
topology: v6e:2x2x1
jax: 0.10.0
libtpu: 0.0.40
codegen_flags: <defaults>
</compile_context>

<pallas_src>
import jax
import jax.numpy as jnp
from jax.experimental import pallas as pl
from jax.experimental.pallas import tpu as pltpu


def _round_up(x, m):
    return ((x + m - 1) // m) * m


def _sublane_pack(dtype):
    # sublane packing granularity: f32 -> 8, bf16 -> 16, int8/fp8 -> 32
    return {4: 8, 2: 16, 1: 32}.get(jnp.dtype(dtype).itemsize, 8)


def _block_bytes(rows, cols, dtype):
    # VMEM footprint of one (rows, cols) block after (sublane, 128) tiling.
    dt = jnp.dtype(dtype)
    r = _round_up(max(int(rows), 1), _sublane_pack(dt))
    c = _round_up(max(int(cols), 1), 128)
    return r * c * dt.itemsize


def _concat_squash_kernel(x_ref, t_ref, wh_ref, bw_ref, o_ref):
    # x_ref:  (tb, D_in)   batch tile of inputs (bf16 or f32)
    # t_ref:  (tb, 1)      time scalar per row (f32)
    # wh_ref: (D_in, tn)   linear_h weight block, stored (in, out)
    # bw_ref: (2, tn)      row 0 = linear_h.bias, row 1 = hyper_bias.w + hyper_gate.w (f32)
    # o_ref:  (tb, tn)     output tile
    h = jnp.dot(x_ref[...], wh_ref[...], preferred_element_type=jnp.float32)
    bw = bw_ref[...]
    h = h + bw[0:1, :]
    # sigmoid(t*wb + t*wg) == sigmoid(t*(wb+wg)); gate math stays f32.
    z = t_ref[...] * bw[1:2, :]
    gate = pl.reciprocal(1.0 + jnp.exp(-z), approx=True)   # exp + vrcp: EUP only
    o_ref[...] = (h * gate).astype(o_ref.dtype)


def concat_squash(x, t, wh, bh, wb, wg, *,
                  tb_target=512, tn_target=1024,
                  matmul_dtype=jnp.bfloat16, out_dtype=None):
    """ConcatSquash forward.

    x:  (B, D_in)      input features
    t:  (B,)           time values (reshaped to (B, 1) as in torch)
    wh: (D_in, D_out)  linear_h.weight transposed to (in, out)
    bh: (D_out,)       linear_h.bias
    wb: (D_out,)       hyper_bias.weight (D_out, 1) squeezed
    wg: (D_out,)       hyper_gate.weight (D_out, 1) squeezed
    matmul_dtype: dtype of the MXU operands (default bf16 on every generation;
                  pass None to keep x.dtype). Accumulation / gate math are f32.
    out_dtype:    output dtype (default x.dtype; bf16 halves the largest HBM
                  stream in this memory-bound layer).
    """
    B, D_in = x.shape
    D_out = wh.shape[1]
    out_dtype = jnp.dtype(x.dtype) if out_dtype is None else jnp.dtype(out_dtype)
    mm_dtype = jnp.dtype(x.dtype) if matmul_dtype is None else jnp.dtype(matmul_dtype)

    # ---- operand prep (no padding of x / out: edge blocks are Pallas-masked) ----
    x_mm = x.astype(mm_dtype)
    wh_mm = wh.astype(mm_dtype)
    t2 = t.reshape(B, 1).astype(jnp.float32)                     # t.view(-1, 1)
    bw = jnp.stack([bh.astype(jnp.float32),
                    (wb + wg).astype(jnp.float32)], axis=0)      # (2, D_out)

    # ---- tile selection ----
    pack = max(_sublane_pack(mm_dtype), _sublane_pack(out_dtype))
    tb = min(_round_up(tb_target, pack), _round_up(B, pack))
    tn = min(_round_up(tn_target, 128), _round_up(D_out, 128))

    # Generation-aware VMEM budget (v7x: 64 MiB physical -> ~48 MiB budget;
    # v5e/v6e: 128 MiB -> ~96 MiB budget).
    try:
        vmem_cap = int(pltpu.get_tpu_info().vmem_capacity_bytes)
    except Exception:
        vmem_cap = 64 * 1024 * 1024          # assume the smallest generation
    budget = (3 * vmem_cap) // 4

    def footprint(tb_, tn_):
        # double-buffered streams, (sublane,128)-tiling aware
        return 2 * (_block_bytes(tb_, D_in, mm_dtype)        # x tile
                    + _block_bytes(tb_, 1, jnp.float32)      # t tile
                    + _block_bytes(D_in, tn_, mm_dtype)      # Wh block
                    + _block_bytes(2, tn_, jnp.float32)      # bias/gate rows
                    + _block_bytes(tb_, tn_, out_dtype))     # output tile

    def limit(tb_, tn_):
        return (3 * footprint(tb_, tn_)) // 2 + (4 << 20)    # + Mosaic scratch slack

    while limit(tb, tn) > budget and tn > 128:
        tn -= 128
    while limit(tb, tn) > budget and tb > pack:
        tb = max(pack, tb - 8 * pack)
    # TODO(synk): if D_in is so large that even a (D_in, 128) weight block blows
    # the VMEM budget (v7x), add a K-tiling grid axis over D_in with an f32
    # accumulator scratch ("arbitrary" axis) instead of shrinking tiles further.

    nb = pl.cdiv(B, tb)
    nj = pl.cdiv(D_out, tn)

    # Keep >= 2 grid iterations when the shape allows so the v7x megacore
    # ("parallel" axes) can shard work across both TensorCores.
    if nb * nj == 1:
        if D_out > 128:
            tn = _round_up(pl.cdiv(D_out, 2), 128)
            nj = pl.cdiv(D_out, tn)
        elif B > pack:
            tb = _round_up(pl.cdiv(B, 2), pack)
            nb = pl.cdiv(B, tb)

    # ---- grid order: minimize streamed HBM bytes of the re-fetched operand ----
    isz = mm_dtype.itemsize
    x_bytes = B * D_in * isz
    wh_bytes = D_in * D_out * isz
    batch_outer_traffic = x_bytes + nb * wh_bytes    # grid=(nb, nj): Wh re-streamed per batch tile
    weight_outer_traffic = wh_bytes + nj * x_bytes   # grid=(nj, nb): x re-streamed per out block

    if batch_outer_traffic <= weight_outer_traffic:
        grid = (nb, nj)
        row_map = lambda i, j: (i, 0)
        col_map = lambda i, j: (0, j)
        out_map = lambda i, j: (i, j)
        streamed = batch_outer_traffic
    else:
        grid = (nj, nb)
        row_map = lambda j, i: (i, 0)
        col_map = lambda j, i: (0, j)
        out_map = lambda j, i: (i, j)
        streamed = weight_outer_traffic

    vmem_limit = int(max(32 * 1024 * 1024, min(limit(tb, tn), budget)))

    cost = pl.CostEstimate(
        flops=2 * B * D_in * D_out,
        transcendentals=B * D_out,                       # exp (EUP)
        bytes_accessed=int(streamed
                           + B * D_out * out_dtype.itemsize
                           + B * 4 + 2 * D_out * 4),
    )

    out = pl.pallas_call(
        _concat_squash_kernel,
        out_shape=jax.ShapeDtypeStruct((B, D_out), out_dtype),
        grid_spec=pltpu.PrefetchScalarGridSpec(
            num_scalar_prefetch=0,
            grid=grid,
            in_specs=[
                pl.BlockSpec((tb, D_in), row_map),    # x tile
                pl.BlockSpec((tb, 1), row_map),       # t tile
                pl.BlockSpec((D_in, tn), col_map),    # Wh block
                pl.BlockSpec((2, tn), col_map),       # [bh ; wb+wg] block
            ],
            out_specs=pl.BlockSpec((tb, tn), out_map),
        ),
        compiler_params=pltpu.CompilerParams(
            dimension_semantics=("parallel", "parallel"),
            vmem_limit_bytes=vmem_limit,
        ),
        cost_estimate=cost,
    )(x_mm, t2, wh_mm, bw)
    return out
    # TODO(synk): if this layer is called repeatedly with the same Wh inside a
    # diffusion step, hoist the weight into VMEM once via cross-call prefetch
    # (P10) instead of re-DMAing it on every pallas_call.


def concat_squash_ref(x, t, wh, bh, wb, wg):
    """Pure-JAX f32 reference with identical semantics (correctness check)."""
    t2 = t.reshape(-1, 1).astype(jnp.float32)
    h = x.astype(jnp.float32) @ wh.astype(jnp.float32) + bh[None, :]
    gate = jax.nn.sigmoid(t2 * wb[None, :] + t2 * wg[None, :])
    return h * gate


if __name__ == "__main__":
    key = jax.random.PRNGKey(0)
    k1, k2, k3, k4, k5, k6, k7, k8 = jax.random.split(key, 8)

    # ---- Case 1: tiny, deliberately non-tile-aligned shapes (ragged edges) ----
    B, D_in, D_out = 10, 32, 80
    # linear_h.weight is (D_out, D_in) in torch; we store the transpose (D_in, D_out).
    wh = jax.random.normal(k1, (D_in, D_out), jnp.float32) * 0.1
    bh = jax.random.normal(k2, (D_out,), jnp.float32) * 0.1
    wb = jax.random.normal(k3, (D_out,), jnp.float32) * 0.1   # hyper_bias.weight squeezed
    wg = jax.random.normal(k4, (D_out,), jnp.float32) * 0.1   # hyper_gate.weight squeezed
    x = jax.random.normal(k5, (B, D_in), jnp.float32)
    t = jax.random.normal(k6, (B,), jnp.float32)

    ref = concat_squash_ref(x, t, wh, bh, wb, wg)

    # f32 matmul path (tight tolerance)
    out_f32 = jax.block_until_ready(concat_squash(x, t, wh, bh, wb, wg,
                                                  matmul_dtype=None))
    assert out_f32.shape == (B, D_out)
    assert jnp.allclose(out_f32, ref, atol=2e-3, rtol=2e-3), "f32 path mismatch"

    # default bf16 matmul path
    out_bf = jax.block_until_ready(concat_squash(x, t, wh, bh, wb, wg))
    assert out_bf.shape == (B, D_out)
    assert jnp.allclose(out_bf, ref, atol=3e-2, rtol=3e-2), "bf16 path mismatch"

    # ---- Case 2: multi-tile grid, ragged tails, bf16 output stream ----
    B2, D_in2, D_out2 = 100, 32, 200
    wh2 = jax.random.normal(k7, (D_in2, D_out2), jnp.float32) * 0.1
    bh2 = jax.random.normal(k8, (D_out2,), jnp.float32) * 0.1
    wb2 = jax.random.normal(k3, (D_out2,), jnp.float32) * 0.1
    wg2 = jax.random.normal(k4, (D_out2,), jnp.float32) * 0.1
    x2 = jax.random.normal(k5, (B2, D_in2), jnp.float32)
    t2 = jax.random.normal(k6, (B2,), jnp.float32)

    ref2 = concat_squash_ref(x2, t2, wh2, bh2, wb2, wg2)
    out2 = jax.block_until_ready(
        concat_squash(x2, t2, wh2, bh2, wb2, wg2, out_dtype=jnp.bfloat16))
    assert out2.shape == (B2, D_out2)
    assert out2.dtype == jnp.bfloat16
    assert jnp.allclose(out2.astype(jnp.float32), ref2, atol=5e-2, rtol=5e-2), \
        "bf16-out path mismatch"

    print("KERNEL_OK")
</pallas_src>

<mosaic_0001>
module attributes {stable_mosaic.version = 11 : i64} {
  func.func @_concat_squash_kernel(%arg0: i32, %arg1: i32, %arg2: memref<8x32xf32, #tpu.memory_space<vmem>>, %arg3: memref<8x1xf32, #tpu.memory_space<vmem>>, %arg4: memref<32x128xf32, #tpu.memory_space<vmem>>, %arg5: memref<2x128xf32, #tpu.memory_space<vmem>>, %arg6: memref<8x128xf32, #tpu.memory_space<vmem>>) attributes {dimension_semantics = [#tpu.dimension_semantics<parallel>, #tpu.dimension_semantics<parallel>], iteration_bounds = array<i64: 1, 2>, scalar_prefetch = 0 : i64, scratch_operands = 0 : i64, tpu.core_type = #tpu.core_type<tc>, window_params = [{transform_indices = @transform_0, window_bounds = array<i64: 8, 32>}, {transform_indices = @transform_1, window_bounds = array<i64: 8, 1>}, {transform_indices = @transform_2, window_bounds = array<i64: 32, 128>}, {transform_indices = @transform_3, window_bounds = array<i64: 2, 128>}, {transform_indices = @transform_4, window_bounds = array<i64: 8, 128>}]} {
    %c0 = arith.constant 0 : index
    %c0_0 = arith.constant 0 : index
    %0 = vector.load %arg2[%c0, %c0_0] : memref<8x32xf32, #tpu.memory_space<vmem>>, vector<8x32xf32>
    %c0_1 = arith.constant 0 : index
    %c0_2 = arith.constant 0 : index
    %1 = vector.load %arg4[%c0_1, %c0_2] : memref<32x128xf32, #tpu.memory_space<vmem>>, vector<32x128xf32>
    %cst = arith.constant dense<0.000000e+00> : vector<8x128xf32>
    %2 = tpu.matmul %0, %1, %cst {dimension_numbers = #tpu.dot_dimension_numbers<[1], [0], [0], [1], [0, 0, 1, 1], [], []>} : vector<8x32xf32>, vector<32x128xf32>, vector<8x128xf32> -> vector<8x128xf32>
    %c0_3 = arith.constant 0 : index
    %c0_4 = arith.constant 0 : index
    %3 = vector.load %arg5[%c0_3, %c0_4] : memref<2x128xf32, #tpu.memory_space<vmem>>, vector<2x128xf32>
    %4 = vector.extract_strided_slice %3 {offsets = [0, 0], sizes = [1, 128], strides = [1, 1]} : vector<2x128xf32> to vector<1x128xf32>
    %5 = vector.broadcast %4 : vector<1x128xf32> to vector<8x128xf32>
    %6 = arith.addf %2, %5 : vector<8x128xf32>
    %c0_5 = arith.constant 0 : index
    %c0_6 = arith.constant 0 : index
    %7 = vector.load %arg3[%c0_5, %c0_6] : memref<8x1xf32, #tpu.memory_space<vmem>>, vector<8x1xf32>
    %8 = vector.extract_strided_slice %3 {offsets = [1, 0], sizes = [1, 128], strides = [1, 1]} : vector<2x128xf32> to vector<1x128xf32>
    %9 = vector.broadcast %7 : vector<8x1xf32> to vector<8x128xf32>
    %10 = vector.broadcast %8 : vector<1x128xf32> to vector<8x128xf32>
    %11 = arith.mulf %9, %10 : vector<8x128xf32>
    %cst_7 = arith.constant 0.000000e+00 : f32
    %12 = vector.broadcast %cst_7 : f32 to vector<8x128xf32>
    %13 = arith.subf %12, %11 : vector<8x128xf32>
    %14 = math.exp %13 : vector<8x128xf32>
    %cst_8 = arith.constant 1.000000e+00 : f32
    %15 = vector.broadcast %cst_8 : f32 to vector<8x128xf32>
    %16 = arith.addf %15, %14 : vector<8x128xf32>
    %17 = tpu.reciprocal %16 {approx = true} : vector<8x128xf32> -> vector<8x128xf32>
    %18 = arith.mulf %6, %17 : vector<8x128xf32>
    %c0_9 = arith.constant 0 : index
    %c0_10 = arith.constant 0 : index
    %19 = vector.load %arg6[%c0_9, %c0_10] : memref<8x128xf32, #tpu.memory_space<vmem>>, vector<8x128xf32>
    tpu.vector_store %arg6[%c0_9, %c0_10], %18 {strides = array<i32>} : memref<8x128xf32, #tpu.memory_space<vmem>>, vector<8x128xf32>,
    return
  }
  func.func @transform_0(%arg0: i32, %arg1: i32) -> (i32, i32) {
    %c0_i32 = arith.constant 0 : i32
    %c0_i32_0 = arith.constant 0 : i32
    return %arg1, %c0_i32 : i32, i32
  }
  func.func @transform_1(%arg0: i32, %arg1: i32) -> (i32, i32) {
    %c0_i32 = arith.constant 0 : i32
    %c0_i32_0 = arith.constant 0 : i32
    return %arg1, %c0_i32 : i32, i32
  }
  func.func @transform_2(%arg0: i32, %arg1: i32) -> (i32, i32) {
    %c0_i32 = arith.constant 0 : i32
    %c0_i32_0 = arith.constant 0 : i32
    return %c0_i32, %arg0 : i32, i32
  }
  func.func @transform_3(%arg0: i32, %arg1: i32) -> (i32, i32) {
    %c0_i32 = arith.constant 0 : i32
    %c0_i32_0 = arith.constant 0 : i32
    return %c0_i32, %arg0 : i32, i32
  }
  func.func @transform_4(%arg0: i32, %arg1: i32) -> (i32, i32) {
    %c0_i32 = arith.constant 0 : i32
    return %arg1, %arg0 : i32, i32
  }
}

</mosaic_0001>

<llo_original>
// kernel: tpu_custom_call.1
$region0: #{tpu_custom_call.1}
  #allocation0 [shape = 'u32[]', space=smem, size = 0x4, offset = 0x4, fixed_abs, tag = 'smem constant byte address 0x4 - core index']
  #allocation1 [shape = 'u32[144,128]{1,0:T(1,128)}', space=vmem, size = 0x12000, scoped, tag = 'internal scratch']
  %s0 = inlined_call_operand.vmem [shape: f32[10,32], index: 0, kind: input, shape index: {}]
  %s1 = inlined_call_operand.vmem [shape: f32[10,1], index: 1, kind: input, shape index: {}]
  %s2 = inlined_call_operand.hbm [shape: f32[32,80], index: 2, kind: input, shape index: {}]
  %s3 = inlined_call_operand.vmem [shape: f32[2,80], index: 3, kind: input, shape index: {}]
  %s4 = inlined_call_operand.hbm [shape: f32[10,80], index: 4, kind: output, shape index: {}]
  %s5 = sld [smem:[#allocation0]]
  $region53: #{tpu_custom_call.1} parent=0
    _
  %s7 = ssub.s32 1, %s5
  %s8 = scalar_select 0, %s7, %s5
  $region1: #{tpu_custom_call.1} parent=0
    #allocation2 [shape = 'u8[16384]{0}', space=vmem, size = 0x4000, scoped, tag = 'input window, operand 2, single buffered']
    #allocation3 [shape = 's32[2]{0}', space=sflag, size = 0x8, scoped, tag = 'scoped memory for tpu_custom_call.1']
    #allocation4 [shape = 's32[2]{0}', space=sflag, size = 0x8, scoped, tag = 'scoped memory for tpu_custom_call.1']
    #allocation5 [shape = 'u8[8192]{0}', space=vmem, size = 0x2000, scoped, tag = 'output window, operand 0']
    %9 = vsyncpa [#allocation3], 0
    %10 = vsyncpa [#allocation4], 0
    %s11 = scalar_lea.sflag [#allocation4], 1
    %12 = vsyncpa %s11, 0
    loop: start=0, step=1, limit=4
    $region2: #{tpu_custom_call.1} parent=1 // loop_pre_header
      _
    $region3: #{tpu_custom_call.1} parent=1 // loop_header
      %s14 = sphi 0, %s18
      %p15 = scmp.ge.s32.totalorder %s14, 4
      %s21 = sphi 0, %s33
      %s22 = sphi 0, %s29
      %s23 = sphi 0, %s21
      %s24 = sphi 0, %s22
      %s25 = sphi 0, %s23
      %s26 = sphi 0, %s24
      %s36 = sphi 0, %s38
      %s39 = sphi 0, %s36
      %s40 = sphi 0, %s39
      %s56 = sphi 0, %s40
      %s62 = sphi 0, %s64
      %s65 = sphi 0, %s62
      %s66 = sphi 0, %s65
      %s82 = sphi 0, %s66
      %s88 = sphi 0, %s90
      %s91 = sphi 0, %s88
      %s92 = sphi 0, %s91
      %s108 = sphi 0, %s92
      %s114 = sphi 0, %s116
      %s117 = sphi 0, %s114
      %s118 = sphi 0, %s117
      %s134 = sphi 0, %s118
      %s142 = sphi 0, %s144
      %s145 = sphi 0, %s142
      %s146 = sphi 0, %s145
      %s162 = sphi 0, %s146
    $region4: #{tpu_custom_call.1} parent=1 // loop_header_branch
      %17 = sbr.rel (%p15) target = $region8
    $region5: #{tpu_custom_call.1} parent=1 // loop_body
      %s19 = ssub.s32 %s14, 1
      %s20 = ssub.s32 %s14, 2
      %s27 = sadd.s32 1, %s22
      %p28 = scmp.ge.s32.totalorder %s27, 2
      %s29 = scalar_select %p28, 0, %s27
      %s30 = sadd.s32 1, %s21
      %s31 = scalar_select %p28, %s30, %s21
      %p32 = scmp.ge.s32.totalorder %s31, 1
      %s33 = scalar_select %p32, 0, %s31
      %s34 = ssub.s32 %s22, %s29
      %p35 = scmp.eq.s32.totalorder %s34, 0
      %s37 = sadd.s32 %s36, 1
      %s38 = scalar_select %p35, %s36, %s37
      %p41 = pneg %p35
      %p42 = scmp.eq.s32.totalorder %s14, 1
      %p43 = por %p41, %p42
      %p44 = scmp.ne.s32.totalorder %s36, %s39
      %p45 = scmp.eq.s32.totalorder %s14, 0
      %p46 = por %p44, %p45
      %p47 = scmp.ne.s32.totalorder %s36, %s39
      %p48 = scmp.eq.s32.totalorder %s19, 1
      %p49 = por %p47, %p48
      %p50 = scmp.ne.s32.totalorder %s39, %s40
      %p51 = scmp.eq.s32.totalorder %s19, 0
      %p52 = por %p50, %p51
      %p53 = scmp.ne.s32.totalorder %s39, %s40
      %p54 = scmp.eq.s32.totalorder %s20, 1
      %p55 = por %p53, %p54
      %p57 = scmp.ne.s32.totalorder %s40, %s56
      %p58 = scmp.eq.s32.totalorder %s20, 0
      %p59 = por %p57, %p58
      %s60 = ssub.s32 %s22, %s29
      %p61 = scmp.eq.s32.totalorder %s60, 0
      %s63 = sadd.s32 %s62, 1
      %s64 = scalar_select %p61, %s62, %s63
      %p67 = pneg %p61
      %p68 = scmp.eq.s32.totalorder %s14, 1
      %p69 = por %p67, %p68
      %p70 = scmp.ne.s32.totalorder %s62, %s65
      %p71 = scmp.eq.s32.totalorder %s14, 0
      %p72 = por %p70, %p71
      %p73 = scmp.ne.s32.totalorder %s62, %s65
      %p74 = scmp.eq.s32.totalorder %s19, 1
      %p75 = por %p73, %p74
      %p76 = scmp.ne.s32.totalorder %s65, %s66
      %p77 = scmp.eq.s32.totalorder %s19, 0
      %p78 = por %p76, %p77
      %p79 = scmp.ne.s32.totalorder %s65, %s66
      %p80 = scmp.eq.s32.totalorder %s20, 1
      %p81 = por %p79, %p80
      %p83 = scmp.ne.s32.totalorder %s66, %s82
      %p84 = scmp.eq.s32.totalorder %s20, 0
      %p85 = por %p83, %p84
      %s86 = ssub.s32 %s21, %s33
      %p87 = scmp.eq.s32.totalorder %s86, 0
      %s89 = sadd.s32 %s88, 1
      %s90 = scalar_select %p87, %s88, %s89
      %p93 = pneg %p87
      %p94 = scmp.eq.s32.totalorder %s14, 1
      %p95 = por %p93, %p94
      %p96 = scmp.ne.s32.totalorder %s88, %s91
      %p97 = scmp.eq.s32.totalorder %s14, 0
      %p98 = por %p96, %p97
      %p99 = scmp.ne.s32.totalorder %s88, %s91
      %p100 = scmp.eq.s32.totalorder %s19, 1
      %p101 = por %p99, %p100
      %p102 = scmp.ne.s32.totalorder %s91, %s92
      %p103 = scmp.eq.s32.totalorder %s19, 0
      %p104 = por %p102, %p103
      %p105 = scmp.ne.s32.totalorder %s91, %s92
      %p106 = scmp.eq.s32.totalorder %s20, 1
      %p107 = por %p105, %p106
      %p109 = scmp.ne.s32.totalorder %s92, %s108
      %p110 = scmp.eq.s32.totalorder %s20, 0
      %p111 = por %p109, %p110
      %s112 = ssub.s32 %s21, %s33
      %p113 = scmp.eq.s32.totalorder %s112, 0
      %s115 = sadd.s32 %s114, 1
      %s116 = scalar_select %p113, %s114, %s115
      %p119 = pneg %p113
      %p120 = scmp.eq.s32.totalorder %s14, 1
      %p121 = por %p119, %p120
      %p122 = scmp.ne.s32.totalorder %s114, %s117
      %p123 = scmp.eq.s32.totalorder %s14, 0
      %p124 = por %p122, %p123
      %p125 = scmp.ne.s32.totalorder %s114, %s117
      %p126 = scmp.eq.s32.totalorder %s19, 1
      %p127 = por %p125, %p126
      %p128 = scmp.ne.s32.totalorder %s117, %s118
      %p129 = scmp.eq.s32.totalorder %s19, 0
      %p130 = por %p128, %p129
      %p131 = scmp.ne.s32.totalorder %s117, %s118
      %p132 = scmp.eq.s32.totalorder %s20, 1
      %p133 = por %p131, %p132
      %p135 = scmp.ne.s32.totalorder %s118, %s134
      %p136 = scmp.eq.s32.totalorder %s20, 0
      %p137 = por %p135, %p136
      %s138 = ssub.s32 %s22, %s29
      %s139 = ssub.s32 %s21, %s33
      %s140 = sor.u32 %s138, %s139
      %p141 = scmp.eq.s32.totalorder %s140, 0
      %s143 = sadd.s32 %s142, 1
      %s144 = scalar_select %p141, %s142, %s143
      %p147 = pneg %p141
      %p148 = scmp.eq.s32.totalorder %s14, 1
      %p149 = por %p147, %p148
      %p150 = scmp.ne.s32.totalorder %s142, %s145
      %p151 = scmp.eq.s32.totalorder %s14, 0
      %p152 = por %p150, %p151
      %p153 = scmp.ne.s32.totalorder %s142, %s145
      %p154 = scmp.eq.s32.totalorder %s19, 1
      %p155 = por %p153, %p154
      %p156 = scmp.ne.s32.totalorder %s145, %s146
      %p157 = scmp.eq.s32.totalorder %s19, 0
      %p158 = por %p156, %p157
      %p159 = scmp.ne.s32.totalorder %s145, %s146
      %p160 = scmp.eq.s32.totalorder %s20, 1
      %p161 = por %p159, %p160
      %p163 = scmp.ne.s32.totalorder %s146, %s162
      %p164 = scmp.eq.s32.totalorder %s20, 0
      %p165 = por %p163, %p164
      %p166 = scmp.le.s32.totalorder 1, %s14
      %p167 = scmp.lt.s32.totalorder %s14, 3
      %p168 = pnand %p166, %p167
      %p169 = pneg %p168
      // Predicated region
      $region9: #{tpu_custom_call.1} parent=5 // pred_check
        _
      $region10: #{tpu_custom_call.1} parent=5 // pred_check_branch
        %171 = sbr.rel (%p168) target = $region12
      $region11: #{tpu_custom_call.1} parent=5 // pred_region
        %s172 = ssub.s32 %s14, 1
        // Predicated region
        $region13: #{tpu_custom_call.1} parent=11 // pred_check
          %p173 = pneg %p104
        $region14: #{tpu_custom_call.1} parent=11 // pred_check_branch
          %175 = sbr.rel (%p173) target = $region16
        $region15: #{tpu_custom_call.1} parent=11 // pred_region
          %s177 = ssub.s32 512, 512
          %178 = vsyncadd [#allocation3], %s177
          %s179 = smul.addr %s23, 128
          %s180 = scalar_lea.hbm %s2, %s179
          %s181 = sshll.u32 [#allocation2], 4
          %s182 = int_to_ptr.vmem [resolvable:$true] %s181
          %187 = dma.hbm_to_vmem [thread:$0]  %s180, 512, %s182, [#allocation3], 128, 128, 8
        $region16: #{tpu_custom_call.1} parent=11 // pred_fallthru
          _
        // Predicated region
        $region17: #{tpu_custom_call.1} parent=11 // pred_check
          %p188 = pneg %p130
        $region18: #{tpu_custom_call.1} parent=11 // pred_check_branch
          %190 = sbr.rel (%p188) target = $region20
        $region19: #{tpu_custom_call.1} parent=11 // pred_region
          %p191 = scmp.lt.s32.totalorder %s23, 0
          %s192 = scalar_select %p191, %s23, 0
          %s193 = smul.addr %s192, 2
          %s194 = scalar_lea.vmem %s3, %s193
        $region20: #{tpu_custom_call.1} parent=11 // pred_fallthru
          _
      $region12: #{tpu_custom_call.1} parent=5 // pred_fallthru
        _
      %p195 = scmp.lt.s32.totalorder %s14, 2
      // Predicated region
      $region21: #{tpu_custom_call.1} parent=5 // pred_check
        %p196 = pneg %p195
      $region22: #{tpu_custom_call.1} parent=5 // pred_check_branch
        %198 = sbr.rel (%p196) target = $region24
      $region23: #{tpu_custom_call.1} parent=5 // pred_region
        // Predicated region
        $region25: #{tpu_custom_call.1} parent=23 // pred_check
          %p199 = pneg %p46
        $region26: #{tpu_custom_call.1} parent=23 // pred_check_branch
          %201 = sbr.rel (%p199) target = $region28
        $region27: #{tpu_custom_call.1} parent=23 // pred_region
          %p202 = scmp.lt.s32.totalorder %s22, 1
          %s203 = scalar_select %p202, %s22, 1
          %s204 = smul.addr %s203, 8
          %s205 = scalar_lea.vmem %s0, %s204
        $region28: #{tpu_custom_call.1} parent=23 // pred_fallthru
          _
        // Predicated region
        $region29: #{tpu_custom_call.1} parent=23 // pred_check
          %p206 = pneg %p72
        $region30: #{tpu_custom_call.1} parent=23 // pred_check_branch
          %208 = sbr.rel (%p206) target = $region32
        $region31: #{tpu_custom_call.1} parent=23 // pred_region
          %p209 = scmp.lt.s32.totalorder %s22, 1
          %s210 = scalar_select %p209, %s22, 1
          %s211 = smul.addr %s210, 8
          %s212 = scalar_lea.vmem %s1, %s211
        $region32: #{tpu_custom_call.1} parent=23 // pred_fallthru
          _
      $region24: #{tpu_custom_call.1} parent=5 // pred_fallthru
        _
      %p213 = scmp.le.s32.totalorder 1, %s14
      %p214 = scmp.lt.s32.totalorder %s14, 3
      %p215 = pnand %p213, %p214
      %p216 = pneg %p215
      // Predicated region
      $region33: #{tpu_custom_call.1} parent=5 // pred_check
        _
      $region34: #{tpu_custom_call.1} parent=5 // pred_check_branch
        %218 = sbr.rel (%p215) target = $region36
      $region35: #{tpu_custom_call.1} parent=5 // pred_region
        %s219 = ssub.s32 %s14, 1
        // Predicated region
        $region37: #{tpu_custom_call.1} parent=35 // pred_check
          %p220 = pneg %p104
        $region38: #{tpu_custom_call.1} parent=35 // pred_check_branch
          %222 = sbr.rel (%p220) target = $region40
        $region39: #{tpu_custom_call.1} parent=35 // pred_region
          %223 = dma.done [#allocation3], 512
        $region40: #{tpu_custom_call.1} parent=35 // pred_fallthru
          _
        %p224 = scmp.lt.s32.totalorder %s24, 1
        %s225 = scalar_select %p224, %s24, 1
        %s226 = smul.addr %s225, 8
        %s227 = scalar_lea.vmem %s0, %s226
        %p228 = pneg %p52
        %p229 = pneg %p49
        %p230 = scmp.lt.s32.totalorder %s24, 1
        %s231 = scalar_select %p230, %s24, 1
        %s232 = smul.addr %s231, 8
        %s233 = scalar_lea.vmem %s1, %s232
        %p234 = pneg %p78
        %p235 = pneg %p75
        %p236 = pneg %p104
        %p237 = pneg %p101
        %p238 = scmp.lt.s32.totalorder %s23, 0
        %s239 = scalar_select %p238, %s23, 0
        %s240 = smul.addr %s239, 2
        %s241 = scalar_lea.vmem %s3, %s240
        %p242 = pneg %p130
        %p243 = pneg %p127
        %p244 = pneg %p158
        %p245 = pneg %p155
        %s246 = sand.u32 %s145, 1
        %s247 = scalar_lea.sflag [#allocation4], %s246
        %s248 = sand.u32 %s145, 1
        %s249 = smul.addr %s248, 8
        %s250 = scalar_lea.vmem [#allocation5], %s249
        %p251 = scmp.lt.s32.totalorder %s24, 1
        %s252 = scalar_select %p251, %s24, 1
        %s253 = smul.addr %s252, 8
        %s254 = scalar_lea.vmem %s0, %s253
        %p255 = scmp.lt.s32.totalorder %s24, 1
        %s256 = scalar_select %p255, %s24, 1
        %s257 = smul.addr %s256, 8
        %s258 = scalar_lea.vmem %s1, %s257
        %p259 = scmp.lt.s32.totalorder %s23, 0
        %s260 = scalar_select %p259, %s23, 0
        %s261 = smul.addr %s260, 2
        %s262 = scalar_lea.vmem %s3, %s261
        %v263 = vld [vmem:[%s254] sm:$0xff]
        %v264 = vld [vmem:[#allocation2] sm:$0xff]
        %v265 = vld [vmem:[#allocation2 + $0x8] sm:$0xff]
        %v266 = vld [vmem:[#allocation2 + $0x10] sm:$0xff]
        %v267 = vld [vmem:[#allocation2 + $0x18] sm:$0xff]
        %v268 = vld [vmem:[%s262] sm:$0x3]
        %v269 = vlaneseq
        %v270 = vshrl.u32 %v269, 7
        %v271 = vsub.s32 0, %v270
        %v272 = vrot.slane %v268, %v271
        %vm273 = vcmask 261120
        %v275 = vsel %vm273, %v263, 0
        %277 = vmatprep.subr.mxu0 0.0
        %278 = vmatpush1.msra.mxu0 0.0
        %279 = vmatprep.subr.mxu0 0.0
        %280 = vmatpush1.msra.mxu0 0.0
        %281 = vmatprep.subr.mxu0 0.0
        %282 = vmatpush1.msra.mxu0 0.0
        %283 = vmatprep.subr.mxu0 0.0
        %284 = vmatpush1.msra.mxu0 0.0
        %285 = vmatprep.subr.mxu0 0.0
        %286 = vmatpush1.msra.mxu0 0.0
        %287 = vmatprep.subr.mxu0 0.0
        %288 = vmatpush1.msra.mxu0 0.0
        %289 = vmatprep.subr.mxu0 0.0
        %290 = vmatpush1.msra.mxu0 0.0
        %291 = vmatprep.subr.mxu0 0.0
        %292 = vmatpush1.msra.mxu0 0.0
        %293 = vmatprep.subr.mxu0 0.0
        %294 = vmatpush1.msra.mxu0 0.0
        %295 = vmatprep.subr.mxu0 0.0
        %296 = vmatpush1.msra.mxu0 0.0
        %297 = vmatprep.subr.mxu0 0.0
        %298 = vmatpush1.msra.mxu0 0.0
        %299 = vmatprep.subr.mxu0 0.0
        %300 = vmatpush1.msra.mxu0 0.0
        %301 = vmatprep.subr.mxu0 0.0
        %302 = vmatpush1.msra.mxu0 %v267
        %303 = vmatprep.subr.mxu0 0.0
        %304 = vmatpush1.msra.mxu0 %v266
        %305 = vmatprep.subr.mxu0 0.0
        %306 = vmatpush1.msra.mxu0 %v265
        %307 = vmatprep.subr.mxu0 0.0
        %308 = vmatpush1.msra.mxu0 %v264
        %309 = vmatprep.subr.mxu0 0.0
        %310 = vmatpush2.msra.mxu0 0.0
        %311 = vmatprep.subr.mxu0 0.0
        %312 = vmatpush2.msra.mxu0 0.0
        %313 = vmatprep.subr.mxu0 0.0
        %314 = vmatpush2.msra.mxu0 0.0
        %315 = vmatprep.subr.mxu0 0.0
        %316 = vmatpush2.msra.mxu0 0.0
        %317 = vmatprep.subr.mxu0 0.0
        %318 = vmatpush2.msra.mxu0 0.0
        %319 = vmatprep.subr.mxu0 0.0
        %320 = vmatpush2.msra.mxu0 0.0
        %321 = vmatprep.subr.mxu0 0.0
        %322 = vmatpush2.msra.mxu0 0.0
        %323 = vmatprep.subr.mxu0 0.0
        %324 = vmatpush2.msra.mxu0 0.0
        %325 = vmatprep.subr.mxu0 0.0
        %326 = vmatpush2.msra.mxu0 0.0
        %327 = vmatprep.subr.mxu0 0.0
        %328 = vmatpush2.msra.mxu0 0.0
        %329 = vmatprep.subr.mxu0 0.0
        %330 = vmatpush2.msra.mxu0 0.0
        %331 = vmatprep.subr.mxu0 0.0
        %332 = vmatpush2.msra.mxu0 0.0
        %333 = vmatprep.subr.mxu0 0.0
        %334 = vmatpush2.msra.mxu0 0.0
        %335 = vmatprep.subr.mxu0 0.0
        %336 = vmatpush2.msra.mxu0 0.0
        %337 = vmatprep.subr.mxu0 0.0
        %338 = vmatpush2.msra.mxu0 0.0
        %339 = vmatprep.subr.mxu0 0.0
        %340 = vmatpush2.msra.mxu0 0.0
        %341 = vmatprep.mubr.f32.mxu0 0.0
        %342 = vmatmul.mubr.f32.gmra.mxu0 %v275
        %v343 = vpop.f32.mrf.mxu0
        %v344 = vadd.f32 %v272, %v343
        %v345 = vpop.f32.mrf.mxu0
        %346 = vdwg.mxu0
        %v347 = vld [vmem:[%s258] sm:$0xff]
        %349 = vset.pattern.permute.xlu0 0
        %350 = vperm.xlu0 %349, %v347
        %v351 = vpop.permute.xlu0 %350
        %v353 = vlaneseq
        %v354 = vshrl.u32 %v353, 7
        %v355 = vsub.s32 1, %v354
        %v356 = vrot.slane %v268, %v355
        %v357 = vmul.f32 %v351, %v356
        %v358 = vsub.f32 0.0, %v357
        %v359 = vmul.f32 %v358, 1.442695
        %v360 = vpow.pop %v359
        %v361 = vadd.f32 %v360, 1.0
        %v362 = vrcp.pop %v361
        %v363 = vmul.f32 %v344, %v362
        %364 = vst [vmem:[%s250] sm:$0xff] %v363
        %s365 = sand.u32 %s145, 1
        %s366 = scalar_lea.sflag [#allocation4], %s365
        %s367 = sand.u32 %s145, 1
        %s368 = smul.addr %s367, 8
        %s369 = scalar_lea.vmem [#allocation5], %s368
        // Predicated region
        $region41: #{tpu_custom_call.1} parent=35 // pred_check
          %p370 = pneg %p155
        $region42: #{tpu_custom_call.1} parent=35 // pred_check_branch
          %372 = sbr.rel (%p370) target = $region44
        $region43: #{tpu_custom_call.1} parent=35 // pred_region
          %s374 = ssub.s32 128, 128
          %375 = vsyncadd %s366, %s374
          %s376 = sadd.s32 %s23, %s24
          %s377 = smul.addr %s376, 128
          %s378 = scalar_lea.hbm %s4, %s377
          %s380 = sshll.u32 %s369, 4
          %s381 = int_to_ptr.vmem [resolvable:$true] %s380
          %383 = dma.vmem_to_hbm [thread:$0]  %s381, 128, %s378, %s366
        $region44: #{tpu_custom_call.1} parent=35 // pred_fallthru
          _
      $region36: #{tpu_custom_call.1} parent=5 // pred_fallthru
        _
      %p384 = scmp.le.s32.totalorder 2, %s14
      // Predicated region
      $region45: #{tpu_custom_call.1} parent=5 // pred_check
        %p385 = pneg %p384
      $region46: #{tpu_custom_call.1} parent=5 // pred_check_branch
        %387 = sbr.rel (%p385) target = $region48
      $region47: #{tpu_custom_call.1} parent=5 // pred_region
        %s388 = ssub.s32 %s14, 2
        // Predicated region
        $region49: #{tpu_custom_call.1} parent=47 // pred_check
          %p389 = pneg %p161
        $region50: #{tpu_custom_call.1} parent=47 // pred_check_branch
          %391 = sbr.rel (%p389) target = $region52
        $region51: #{tpu_custom_call.1} parent=47 // pred_region
          %s392 = sand.u32 %s146, 1
          %s393 = scalar_lea.sflag [#allocation4], %s392
          %s394 = sand.u32 %s146, 1
          %s395 = smul.addr %s394, 8
          %s396 = scalar_lea.vmem [#allocation5], %s395
          %397 = dma.done %s393, 128
        $region52: #{tpu_custom_call.1} parent=47 // pred_fallthru
          _
      $region48: #{tpu_custom_call.1} parent=5 // pred_fallthru
        _
    $region6: #{tpu_custom_call.1} parent=1 // loop_footer
      %s18 = sadd.s32 1, %s14
    $region7: #{tpu_custom_call.1} parent=1 // loop_footer_branch
      %13 = sbr.rel target = $region3
    $region8: #{tpu_custom_call.1} parent=1 // loop_exit
      _
    %398 = vsyncpa [#allocation3], 1
    %s399 = scalar_lea.sflag [#allocation3], 1
    %400 = vsyncpa %s399, 1
    %401 = vsyncpa [#allocation4], 1
    %s402 = scalar_lea.sflag [#allocation4], 1
    %403 = vsyncpa %s402, 1

</llo_original>
